<compile_context>
chip_gen: v7x
topology: tpu7x:2x2x1
jax: 0.10.0
libtpu: 0.0.40
codegen_flags: <defaults>
</compile_context>

<pallas_src>
import jax
import jax.numpy as jnp
from jax.experimental import pallas as pl
from jax.experimental.pallas import tpu as pltpu


def _round_down(x, m):
    return (x // m) * m


def _round_up(x, m):
    return ((x + m - 1) // m) * m


def _classhead_kernel(w_ref, b_ref, x_ref, o_ref):
    # w_ref: (A2, C), b_ref: (A2, 1) f32, x_ref: (C, TL), o_ref: (A2, TL)
    acc = jnp.dot(w_ref[...], x_ref[...], preferred_element_type=jnp.float32)
    o_ref[...] = (acc + b_ref[...]).astype(o_ref.dtype)


def class_head_forward(x, weight, bias, num_anchors=3,
                       x_tile_budget_bytes=8 << 20, x_buffers=2):
    """ClassHead forward.

    x:      (N, C, H, W) float32 or bfloat16 (NCHW, as in PyTorch)
    weight: (A2, C) or (A2, C, 1, 1)  1x1-conv weight in PyTorch (out, in) layout
    bias:   (A2,)
    returns (N, H*W*num_anchors, 2), identical ordering to the PyTorch module.
    """
    N, C, H, W = x.shape
    A2 = num_anchors * 2
    if weight.ndim == 4:  # PyTorch conv weight (O, I, 1, 1)
        weight = weight.reshape(weight.shape[0], weight.shape[1])
    assert weight.shape == (A2, C) and bias.shape == (A2,)

    HW = H * W
    itemsize = jnp.dtype(x.dtype).itemsize

    # Free layout views (no data movement): NCHW -> (N, C, HW).
    x_cols = x.reshape(N, C, HW)
    w = weight.astype(x.dtype)                    # bf16-friendly MXU operand
    b_col = bias.astype(jnp.float32).reshape(A2, 1)  # f32 bias for conv numerics

    # --- Adaptive spatial tile: sized from the per-buffer VMEM budget. ------
    tl_budget = _round_down(max(x_tile_budget_bytes // (C * itemsize), 128), 128)
    if HW <= tl_budget:
        tl = HW                       # single full-extent tile (always legal)
    else:
        tl = tl_budget                # multiple of 128; ragged tail is clipped

    # --- Megacore: avoid a (1, 1) grid that idles v7x's second TensorCore. --
    if N == 1 and tl == HW and HW >= 256:
        split = _round_up(pl.cdiv(HW, 2), 128)
        if split < HW:
            tl = split

    n_tiles = pl.cdiv(HW, tl)

    # --- Explicit VMEM limit derived from the actual footprint. -------------
    x_tile_bytes = C * tl * itemsize
    o_tile_bytes = A2 * tl * itemsize
    w_bytes = A2 * C * itemsize + A2 * 4
    needed = max(x_buffers, 2) * x_tile_bytes + 2 * o_tile_bytes + 2 * w_bytes
    vmem_limit = int(min(max(needed + (8 << 20), 32 << 20), 48 << 20))

    # --- Cost hint for XLA's scheduler (three heads run back-to-back). ------
    cost = pl.CostEstimate(
        flops=2 * N * A2 * C * HW,
        transcendentals=0,
        bytes_accessed=N * C * HW * itemsize + N * A2 * HW * itemsize
                       + A2 * C * itemsize,
    )

    x_spec_kwargs = {}
    if x_buffers != 2:
        x_spec_kwargs["pipeline_mode"] = pl.Buffered(x_buffers)
    x_spec = pl.BlockSpec((None, C, tl), lambda n, j: (n, 0, j), **x_spec_kwargs)

    out_nchw = pl.pallas_call(
        _classhead_kernel,
        out_shape=jax.ShapeDtypeStruct((N, A2, HW), x.dtype),
        grid_spec=pltpu.PrefetchScalarGridSpec(
            num_scalar_prefetch=0,
            grid=(N, n_tiles),
            in_specs=[
                pl.BlockSpec((A2, C), lambda n, j: (0, 0)),   # weight (resident)
                pl.BlockSpec((A2, 1), lambda n, j: (0, 0)),   # bias   (resident, f32)
                x_spec,                                       # x tile (C, TL)
            ],
            out_specs=pl.BlockSpec((None, A2, tl), lambda n, j: (n, 0, j)),
        ),
        compiler_params=pltpu.CompilerParams(
            dimension_semantics=("parallel", "parallel"),
            vmem_limit_bytes=vmem_limit),
        cost_estimate=cost,
    )(w, b_col, x_cols)

    # Cheap channels-last permute on the small A2-channel output, then the
    # PyTorch .view(N, -1, 2): flat order is (h, w, anchor, class).
    # (Kept outside the kernel: at C=512 it is ~2% extra HBM traffic and XLA
    #  can fuse it into the downstream softmax / FPN concat.)
    return jnp.transpose(out_nchw, (0, 2, 1)).reshape(N, HW * num_anchors, 2)


if __name__ == "__main__":
    key = jax.random.PRNGKey(0)
    kx, kw, kb = jax.random.split(key, 3)

    # Small, consistent shapes: batch=2, inchannels=32, spatial 16x16, num_anchors=3
    N, C, H, W = 2, 32, 16, 16
    num_anchors = 3
    A2 = num_anchors * 2

    x = jax.random.normal(kx, (N, C, H, W), dtype=jnp.float32)
    weight = jax.random.normal(kw, (A2, C), dtype=jnp.float32) * 0.05  # conv1x1 (O, I)
    bias = jax.random.normal(kb, (A2,), dtype=jnp.float32) * 0.05

    # float32 path
    out = class_head_forward(x, weight, bias, num_anchors=num_anchors)
    out = jax.block_until_ready(out)
    ref = jnp.einsum("nchw,oc->nhwo", x, weight) + bias
    ref = ref.reshape(N, H * W * num_anchors, 2)
    assert out.shape == (N, H * W * num_anchors, 2)
    assert jnp.allclose(out, ref, atol=1e-4, rtol=1e-4)

    # bfloat16 path (HBM-read-bound kernel: halving x bytes ~ doubles roofline)
    xb = x.astype(jnp.bfloat16)
    out_bf16 = class_head_forward(xb, weight, bias, num_anchors=num_anchors)
    out_bf16 = jax.block_until_ready(out_bf16)
    assert out_bf16.shape == (N, H * W * num_anchors, 2)
    assert out_bf16.dtype == jnp.bfloat16
    ref_bf16 = (jnp.einsum("nchw,oc->nhwo",
                           xb.astype(jnp.float32),
                           weight.astype(jnp.bfloat16).astype(jnp.float32)) + bias)
    ref_bf16 = ref_bf16.reshape(N, H * W * num_anchors, 2)
    assert jnp.allclose(out_bf16.astype(jnp.float32), ref_bf16, atol=3e-2, rtol=3e-2)

    print("KERNEL_OK")
</pallas_src>

<mosaic_0001>
module attributes {stable_mosaic.version = 11 : i64} {
  func.func @_classhead_kernel(%arg0: i32, %arg1: i32, %arg2: memref<6x32xf32, #tpu.memory_space<vmem>>, %arg3: memref<6x1xf32, #tpu.memory_space<vmem>>, %arg4: memref<1x32x256xf32, #tpu.memory_space<vmem>>, %arg5: memref<1x6x256xf32, #tpu.memory_space<vmem>>) attributes {dimension_semantics = [#tpu.dimension_semantics<parallel>, #tpu.dimension_semantics<parallel>], iteration_bounds = array<i64: 2, 1>, scalar_prefetch = 0 : i64, scratch_operands = 0 : i64, tpu.core_type = #tpu.core_type<tc>, window_params = [{pipeline_mode = #tpu.pipeline_mode<synchronous>, transform_indices = @transform_0, window_bounds = array<i64: 6, 32>}, {pipeline_mode = #tpu.pipeline_mode<synchronous>, transform_indices = @transform_1, window_bounds = array<i64: 6, 1>}, {transform_indices = @transform_2, window_bounds = array<i64: 1, 32, 256>}, {transform_indices = @transform_3, window_bounds = array<i64: 1, 6, 256>}]} {
    %c0 = arith.constant 0 : index
    %c0_0 = arith.constant 0 : index
    %0 = vector.load %arg2[%c0, %c0_0] : memref<6x32xf32, #tpu.memory_space<vmem>>, vector<6x32xf32>
    %c0_1 = arith.constant 0 : index
    %c0_2 = arith.constant 0 : index
    %c0_3 = arith.constant 0 : index
    %1 = vector.load %arg4[%c0_1, %c0_2, %c0_3] : memref<1x32x256xf32, #tpu.memory_space<vmem>>, vector<1x32x256xf32>
    %2 = vector.shape_cast %1 : vector<1x32x256xf32> to vector<32x256xf32>
    %cst = arith.constant dense<0.000000e+00> : vector<6x256xf32>
    %3 = tpu.matmul %0, %2, %cst {dimension_numbers = #tpu.dot_dimension_numbers<[1], [0], [0], [1], [0, 0, 1, 1], [], []>} : vector<6x32xf32>, vector<32x256xf32>, vector<6x256xf32> -> vector<6x256xf32>
    %c0_4 = arith.constant 0 : index
    %c0_5 = arith.constant 0 : index
    %4 = vector.load %arg3[%c0_4, %c0_5] : memref<6x1xf32, #tpu.memory_space<vmem>>, vector<6x1xf32>
    %5 = vector.broadcast %4 : vector<6x1xf32> to vector<6x256xf32>
    %6 = arith.addf %3, %5 : vector<6x256xf32>
    %c0_6 = arith.constant 0 : index
    %c0_7 = arith.constant 0 : index
    %c0_8 = arith.constant 0 : index
    %7 = vector.load %arg5[%c0_6, %c0_7, %c0_8] : memref<1x6x256xf32, #tpu.memory_space<vmem>>, vector<1x6x256xf32>
    %8 = vector.shape_cast %7 : vector<1x6x256xf32> to vector<6x256xf32>
    %9 = vector.shape_cast %6 : vector<6x256xf32> to vector<1x6x256xf32>
    tpu.vector_store %arg5[%c0_6, %c0_7, %c0_8], %9 {strides = array<i32>} : memref<1x6x256xf32, #tpu.memory_space<vmem>>, vector<1x6x256xf32>,
    return
  }
  func.func @transform_0(%arg0: i32, %arg1: i32) -> (i32, i32) {
    %c0_i32 = arith.constant 0 : i32
    %c0_i32_0 = arith.constant 0 : i32
    %c0_i32_1 = arith.constant 0 : i32
    return %c0_i32, %c0_i32_0 : i32, i32
  }
  func.func @transform_1(%arg0: i32, %arg1: i32) -> (i32, i32) {
    %c0_i32 = arith.constant 0 : i32
    %c0_i32_0 = arith.constant 0 : i32
    %c0_i32_1 = arith.constant 0 : i32
    return %c0_i32, %c0_i32_0 : i32, i32
  }
  func.func @transform_2(%arg0: i32, %arg1: i32) -> (i32, i32, i32) {
    %c0_i32 = arith.constant 0 : i32
    %c0_i32_0 = arith.constant 0 : i32
    return %arg0, %c0_i32, %arg1 : i32, i32, i32
  }
  func.func @transform_3(%arg0: i32, %arg1: i32) -> (i32, i32, i32) {
    %c0_i32 = arith.constant 0 : i32
    %c0_i32_0 = arith.constant 0 : i32
    return %arg0, %c0_i32, %arg1 : i32, i32, i32
  }
}

</mosaic_0001>

<llo_original>
// kernel: tpu_custom_call.1
$region0: #{tpu_custom_call.1}
  #allocation0 [shape = 'u32[]', space=smem, size = 0x4, offset = 0x4, fixed_abs, tag = 'smem constant byte address 0x4 - core index']
  #allocation1 [shape = 'u32[144,128]{1,0:T(1,128)}', space=vmem, size = 0x12000, scoped, tag = 'internal scratch']
  %s0 = inlined_call_operand.vmem [shape: f32[6,32], index: 0, kind: input, shape index: {}]
  %s1 = inlined_call_operand.vmem [shape: f32[6,1], index: 1, kind: input, shape index: {}]
  %s2 = inlined_call_operand.hbm [shape: f32[2,32,256], index: 2, kind: input, shape index: {}]
  %s3 = inlined_call_operand.vmem [shape: f32[2,6,256], index: 3, kind: output, shape index: {}]
  %s4 = sld [smem:[#allocation0]]
  $region49: #{tpu_custom_call.1} parent=0
    _
  %s6 = ssub.s32 1, %s4
  %s7 = scalar_select 0, %s6, %s4
  $region1: #{tpu_custom_call.1} parent=0
    #allocation2 [shape = 'u8[65536]{0}', space=vmem, size = 0x10000, scoped, tag = 'input window, operand 2']
    #allocation3 [shape = 's32[2]{0}', space=sflag, size = 0x8, scoped, tag = 'scoped memory for tpu_custom_call.1']
    %8 = vsyncpa [#allocation3], 0
    %s9 = scalar_lea.sflag [#allocation3], 1
    %10 = vsyncpa %s9, 0
    loop: start=0, step=1, limit=4
    $region2: #{tpu_custom_call.1} parent=1 // loop_pre_header
      _
    $region3: #{tpu_custom_call.1} parent=1 // loop_header
      %s12 = sphi 0, %s16
      %p13 = scmp.ge.s32.totalorder %s12, 4
      %s19 = sphi 0, %s31
      %s20 = sphi 0, %s27
      %s21 = sphi 0, %s19
      %s22 = sphi 0, %s20
      %s23 = sphi 0, %s21
      %s24 = sphi 0, %s22
      %s32 = sphi 0, %s32
      %s34 = sphi 0, %s32
      %s35 = sphi 0, %s34
      %s49 = sphi 0, %s35
      %s53 = sphi 0, %s53
      %s55 = sphi 0, %s53
      %s56 = sphi 0, %s55
      %s70 = sphi 0, %s56
      %s78 = sphi 0, %s80
      %s81 = sphi 0, %s78
      %s82 = sphi 0, %s81
      %s98 = sphi 0, %s82
      %s106 = sphi 0, %s108
      %s109 = sphi 0, %s106
      %s110 = sphi 0, %s109
      %s126 = sphi 0, %s110
    $region4: #{tpu_custom_call.1} parent=1 // loop_header_branch
      %15 = sbr.rel (%p13) target = $region8
    $region5: #{tpu_custom_call.1} parent=1 // loop_body
      %s17 = ssub.s32 %s12, 1
      %s18 = ssub.s32 %s12, 2
      %s25 = sadd.s32 1, %s20
      %p26 = scmp.ge.s32.totalorder %s25, 1
      %s27 = scalar_select %p26, 0, %s25
      %s28 = sadd.s32 1, %s19
      %s29 = scalar_select %p26, %s28, %s19
      %p30 = scmp.ge.s32.totalorder %s29, 2
      %s31 = scalar_select %p30, 0, %s29
      %s33 = sadd.s32 %s32, 1
      %p36 = scmp.eq.s32.totalorder %s12, 1
      %p37 = scmp.ne.s32.totalorder %s32, %s34
      %p38 = scmp.eq.s32.totalorder %s12, 0
      %p39 = por %p37, %p38
      %p40 = scmp.ne.s32.totalorder %s32, %s34
      %p41 = scmp.eq.s32.totalorder %s17, 1
      %p42 = por %p40, %p41
      %p43 = scmp.ne.s32.totalorder %s34, %s35
      %p44 = scmp.eq.s32.totalorder %s17, 0
      %p45 = por %p43, %p44
      %p46 = scmp.ne.s32.totalorder %s34, %s35
      %p47 = scmp.eq.s32.totalorder %s18, 1
      %p48 = por %p46, %p47
      %p50 = scmp.ne.s32.totalorder %s35, %s49
      %p51 = scmp.eq.s32.totalorder %s18, 0
      %p52 = por %p50, %p51
      %s54 = sadd.s32 %s53, 1
      %p57 = scmp.eq.s32.totalorder %s12, 1
      %p58 = scmp.ne.s32.totalorder %s53, %s55
      %p59 = scmp.eq.s32.totalorder %s12, 0
      %p60 = por %p58, %p59
      %p61 = scmp.ne.s32.totalorder %s53, %s55
      %p62 = scmp.eq.s32.totalorder %s17, 1
      %p63 = por %p61, %p62
      %p64 = scmp.ne.s32.totalorder %s55, %s56
      %p65 = scmp.eq.s32.totalorder %s17, 0
      %p66 = por %p64, %p65
      %p67 = scmp.ne.s32.totalorder %s55, %s56
      %p68 = scmp.eq.s32.totalorder %s18, 1
      %p69 = por %p67, %p68
      %p71 = scmp.ne.s32.totalorder %s56, %s70
      %p72 = scmp.eq.s32.totalorder %s18, 0
      %p73 = por %p71, %p72
      %s74 = ssub.s32 %s19, %s31
      %s75 = ssub.s32 %s20, %s27
      %s76 = sor.u32 %s74, %s75
      %p77 = scmp.eq.s32.totalorder %s76, 0
      %s79 = sadd.s32 %s78, 1
      %s80 = scalar_select %p77, %s78, %s79
      %p83 = pneg %p77
      %p84 = scmp.eq.s32.totalorder %s12, 1
      %p85 = por %p83, %p84
      %p86 = scmp.ne.s32.totalorder %s78, %s81
      %p87 = scmp.eq.s32.totalorder %s12, 0
      %p88 = por %p86, %p87
      %p89 = scmp.ne.s32.totalorder %s78, %s81
      %p90 = scmp.eq.s32.totalorder %s17, 1
      %p91 = por %p89, %p90
      %p92 = scmp.ne.s32.totalorder %s81, %s82
      %p93 = scmp.eq.s32.totalorder %s17, 0
      %p94 = por %p92, %p93
      %p95 = scmp.ne.s32.totalorder %s81, %s82
      %p96 = scmp.eq.s32.totalorder %s18, 1
      %p97 = por %p95, %p96
      %p99 = scmp.ne.s32.totalorder %s82, %s98
      %p100 = scmp.eq.s32.totalorder %s18, 0
      %p101 = por %p99, %p100
      %s102 = ssub.s32 %s19, %s31
      %s103 = ssub.s32 %s20, %s27
      %s104 = sor.u32 %s102, %s103
      %p105 = scmp.eq.s32.totalorder %s104, 0
      %s107 = sadd.s32 %s106, 1
      %s108 = scalar_select %p105, %s106, %s107
      %p111 = pneg %p105
      %p112 = scmp.eq.s32.totalorder %s12, 1
      %p113 = por %p111, %p112
      %p114 = scmp.ne.s32.totalorder %s106, %s109
      %p115 = scmp.eq.s32.totalorder %s12, 0
      %p116 = por %p114, %p115
      %p117 = scmp.ne.s32.totalorder %s106, %s109
      %p118 = scmp.eq.s32.totalorder %s17, 1
      %p119 = por %p117, %p118
      %p120 = scmp.ne.s32.totalorder %s109, %s110
      %p121 = scmp.eq.s32.totalorder %s17, 0
      %p122 = por %p120, %p121
      %p123 = scmp.ne.s32.totalorder %s109, %s110
      %p124 = scmp.eq.s32.totalorder %s18, 1
      %p125 = por %p123, %p124
      %p127 = scmp.ne.s32.totalorder %s110, %s126
      %p128 = scmp.eq.s32.totalorder %s18, 0
      %p129 = por %p127, %p128
      %p130 = scmp.le.s32.totalorder 1, %s12
      %p131 = scmp.lt.s32.totalorder %s12, 3
      %p132 = pnand %p130, %p131
      %p133 = pneg %p132
      // Predicated region
      $region9: #{tpu_custom_call.1} parent=5 // pred_check
        _
      $region10: #{tpu_custom_call.1} parent=5 // pred_check_branch
        %135 = sbr.rel (%p132) target = $region12
      $region11: #{tpu_custom_call.1} parent=5 // pred_region
        %s136 = ssub.s32 %s12, 1
        // Predicated region
        $region13: #{tpu_custom_call.1} parent=11 // pred_check
          %p137 = pneg %p45
        $region14: #{tpu_custom_call.1} parent=11 // pred_check_branch
          %139 = sbr.rel (%p137) target = $region16
        $region15: #{tpu_custom_call.1} parent=11 // pred_region
          _
        $region16: #{tpu_custom_call.1} parent=11 // pred_fallthru
          _
        // Predicated region
        $region17: #{tpu_custom_call.1} parent=11 // pred_check
          %p140 = pneg %p66
        $region18: #{tpu_custom_call.1} parent=11 // pred_check_branch
          %142 = sbr.rel (%p140) target = $region20
        $region19: #{tpu_custom_call.1} parent=11 // pred_region
          _
        $region20: #{tpu_custom_call.1} parent=11 // pred_fallthru
          _
      $region12: #{tpu_custom_call.1} parent=5 // pred_fallthru
        _
      %p143 = scmp.lt.s32.totalorder %s12, 2
      // Predicated region
      $region21: #{tpu_custom_call.1} parent=5 // pred_check
        %p144 = pneg %p143
      $region22: #{tpu_custom_call.1} parent=5 // pred_check_branch
        %146 = sbr.rel (%p144) target = $region24
      $region23: #{tpu_custom_call.1} parent=5 // pred_region
        // Predicated region
        $region25: #{tpu_custom_call.1} parent=23 // pred_check
          %p147 = pneg %p88
        $region26: #{tpu_custom_call.1} parent=23 // pred_check_branch
          %149 = sbr.rel (%p147) target = $region28
        $region27: #{tpu_custom_call.1} parent=23 // pred_region
          %s150 = sand.u32 %s78, 1
          %s151 = scalar_lea.sflag [#allocation3], %s150
          %s152 = sand.u32 %s78, 1
          %s153 = smul.addr %s152, 64
          %s154 = scalar_lea.vmem [#allocation2], %s153
          %s155 = smul.u32 2, %s20
          %s157 = ssub.s32 1024, 1024
          %158 = vsyncadd %s151, %s157
          %s159 = smul.addr %s19, 8
          %s160 = sadd.s32 %s155, %s159
          %s161 = smul.addr %s160, 128
          %s162 = scalar_lea.hbm %s2, %s161
          %s163 = sshll.u32 %s154, 4
          %s164 = int_to_ptr.vmem [resolvable:$true] %s163
          %169 = dma.hbm_to_vmem [thread:$0]  %s162, 1024, %s164, %s151, 256, 256, 16
        $region28: #{tpu_custom_call.1} parent=23 // pred_fallthru
          _
      $region24: #{tpu_custom_call.1} parent=5 // pred_fallthru
        _
      %p170 = scmp.le.s32.totalorder 1, %s12
      %p171 = scmp.lt.s32.totalorder %s12, 3
      %p172 = pnand %p170, %p171
      %p173 = pneg %p172
      // Predicated region
      $region29: #{tpu_custom_call.1} parent=5 // pred_check
        _
      $region30: #{tpu_custom_call.1} parent=5 // pred_check_branch
        %175 = sbr.rel (%p172) target = $region32
      $region31: #{tpu_custom_call.1} parent=5 // pred_region
        %s176 = ssub.s32 %s12, 1
        %s177 = sand.u32 %s81, 1
        %s178 = scalar_lea.sflag [#allocation3], %s177
        %s179 = sand.u32 %s81, 1
        %s180 = smul.addr %s179, 64
        %s181 = scalar_lea.vmem [#allocation2], %s180
        // Predicated region
        $region33: #{tpu_custom_call.1} parent=31 // pred_check
          %p182 = pneg %p94
        $region34: #{tpu_custom_call.1} parent=31 // pred_check_branch
          %184 = sbr.rel (%p182) target = $region36
        $region35: #{tpu_custom_call.1} parent=31 // pred_region
          %185 = dma.done %s178, 1024
        $region36: #{tpu_custom_call.1} parent=31 // pred_fallthru
          _
        %p186 = pneg %p45
        %p187 = pneg %p42
        %p188 = pneg %p66
        %p189 = pneg %p63
        %s190 = sand.u32 %s81, 1
        %s191 = scalar_lea.sflag [#allocation3], %s190
        %s192 = sand.u32 %s81, 1
        %s193 = smul.addr %s192, 64
        %s194 = scalar_lea.vmem [#allocation2], %s193
        %p195 = pneg %p94
        %p196 = pneg %p91
        %p197 = pneg %p122
        %p198 = pneg %p119
        %s199 = smul.u32 2, %s22
        %p200 = scmp.lt.s32.totalorder %s21, 1
        %s201 = scalar_select %p200, %s21, 1
        %p202 = scmp.lt.s32.totalorder %s199, 1
        %s203 = scalar_select %p202, %s199, 1
        %s204 = smul.addr %s201, 2
        %s205 = sadd.s32 %s203, %s204
        %s206 = smul.addr %s205, 8
        %s207 = scalar_lea.vmem %s3, %s206
        %s208 = smul.u32 2, %s22
        %s209 = smul.u32 2, %s22
        %p210 = scmp.lt.s32.totalorder %s21, 1
        %s211 = scalar_select %p210, %s21, 1
        %p212 = scmp.lt.s32.totalorder %s209, 1
        %s213 = scalar_select %p212, %s209, 1
        %s214 = smul.addr %s211, 2
        %s215 = sadd.s32 %s213, %s214
        %s216 = smul.addr %s215, 8
        %s217 = scalar_lea.vmem %s3, %s216
        %s218 = smul.u32 2, %s22
        %v219 = vld [vmem:[%s0] sm:$0x3f]
        %v220 = vld [vmem:[%s181] sm:$0xff]
        %v221 = vld [vmem:[%s181 + $0x8] sm:$0xff]
        %v222 = vld [vmem:[%s181 + $0x10] sm:$0xff]
        %v223 = vld [vmem:[%s181 + $0x18] sm:$0xff]
        %v224 = vld [vmem:[%s181 + $0x20] sm:$0xff]
        %v225 = vld [vmem:[%s181 + $0x28] sm:$0xff]
        %v226 = vld [vmem:[%s181 + $0x30] sm:$0xff]
        %v227 = vld [vmem:[%s181 + $0x38] sm:$0xff]
        %v228 = vld [vmem:[%s1] sm:$0x3f]
        %230 = vset.pattern.permute.xlu0 0
        %231 = vperm.xlu0 %230, %v228
        %v232 = vpop.permute.xlu0 %231
        %vm234 = vcmask 261120
        %v236 = vsel %vm234, %v219, 0
        %238 = vmatprep.subr.mxu0 %v221
        %239 = vmatpush1.msra.mxu0 %v220
        %240 = vmatprep.subr.mxu0 %v223
        %241 = vmatpush1.msra.mxu0 %v222
        %242 = vmatprep.subr.mxu0 %v225
        %243 = vmatpush1.msra.mxu0 %v224
        %244 = vmatprep.subr.mxu0 %v227
        %245 = vmatpush1.msra.mxu0 %v226
        %246 = vmatprep.subr.mxu0 0.0
        %247 = vmatpush1.msra.mxu0 0.0
        %248 = vmatprep.subr.mxu0 0.0
        %249 = vmatpush1.msra.mxu0 0.0
        %250 = vmatprep.subr.mxu0 0.0
        %251 = vmatpush1.msra.mxu0 0.0
        %252 = vmatprep.subr.mxu0 0.0
        %253 = vmatpush1.msra.mxu0 0.0
        %254 = vmatprep.subr.mxu0 0.0
        %255 = vmatpush1.msra.mxu0 0.0
        %256 = vmatprep.subr.mxu0 0.0
        %257 = vmatpush1.msra.mxu0 0.0
        %258 = vmatprep.subr.mxu0 0.0
        %259 = vmatpush1.msra.mxu0 0.0
        %260 = vmatprep.subr.mxu0 0.0
        %261 = vmatpush1.msra.mxu0 0.0
        %262 = vmatprep.subr.mxu0 0.0
        %263 = vmatpush1.msra.mxu0 0.0
        %264 = vmatprep.subr.mxu0 0.0
        %265 = vmatpush1.msra.mxu0 0.0
        %266 = vmatprep.subr.mxu0 0.0
        %267 = vmatpush1.msra.mxu0 0.0
        %268 = vmatprep.subr.mxu0 0.0
        %269 = vmatpush1.msra.mxu0 0.0
        %270 = vmatprep.subr.mxu0 0.0
        %271 = vmatpush1.msra.mxu0 0.0
        %272 = vmatprep.subr.mxu0 0.0
        %273 = vmatpush1.msra.mxu0 0.0
        %274 = vmatprep.subr.mxu0 0.0
        %275 = vmatpush1.msra.mxu0 0.0
        %276 = vmatprep.subr.mxu0 0.0
        %277 = vmatpush1.msra.mxu0 0.0
        %278 = vmatprep.subr.mxu0 0.0
        %279 = vmatpush1.msra.mxu0 0.0
        %280 = vmatprep.subr.mxu0 0.0
        %281 = vmatpush1.msra.mxu0 0.0
        %282 = vmatprep.subr.mxu0 0.0
        %283 = vmatpush1.msra.mxu0 0.0
        %284 = vmatprep.subr.mxu0 0.0
        %285 = vmatpush1.msra.mxu0 0.0
        %286 = vmatprep.subr.mxu0 0.0
        %287 = vmatpush1.msra.mxu0 0.0
        %288 = vmatprep.subr.mxu0 0.0
        %289 = vmatpush1.msra.mxu0 0.0
        %290 = vmatprep.subr.mxu0 0.0
        %291 = vmatpush1.msra.mxu0 0.0
        %292 = vmatprep.subr.mxu0 0.0
        %293 = vmatpush1.msra.mxu0 0.0
        %294 = vmatprep.subr.mxu0 0.0
        %295 = vmatpush1.msra.mxu0 0.0
        %296 = vmatprep.subr.mxu0 0.0
        %297 = vmatpush1.msra.mxu0 0.0
        %298 = vmatprep.subr.mxu0 0.0
        %299 = vmatpush1.msra.mxu0 0.0
        %300 = vmatprep.subr.mxu0 0.0
        %301 = vmatpush1.msra.mxu0 0.0
        %302 = vmatprep.mubr.f32.mxu0 0.0
        %303 = vmatmul.mubr.f32.gmra.mrb[0].mxu0 %v236
        %v304 = vpop.f32.mrb[0].mxu0
        %v305 = vadd.f32 %v232, %v304
        %v306 = vpop.f32.mrb[0].mxu0
        %v307 = vadd.f32 %v232, %v306
        %308 = vdwg.mxu0
        %309 = vst [vmem:[%s217] sm:$0x3f] %v305
        %310 = vst [vmem:[%s217 + $0x8] sm:$0x3f] %v307
        %s311 = smul.u32 2, %s22
        %p312 = scmp.lt.s32.totalorder %s21, 1
        %s313 = scalar_select %p312, %s21, 1
        %p314 = scmp.lt.s32.totalorder %s311, 1
        %s315 = scalar_select %p314, %s311, 1
        %s316 = smul.addr %s313, 2
        %s317 = sadd.s32 %s315, %s316
        %s318 = smul.addr %s317, 8
        %s319 = scalar_lea.vmem %s3, %s318
        // Predicated region
        $region37: #{tpu_custom_call.1} parent=31 // pred_check
          %p320 = pneg %p119
        $region38: #{tpu_custom_call.1} parent=31 // pred_check_branch
          %322 = sbr.rel (%p320) target = $region40
        $region39: #{tpu_custom_call.1} parent=31 // pred_region
          %s323 = smul.u32 2, %s22
        $region40: #{tpu_custom_call.1} parent=31 // pred_fallthru
          _
      $region32: #{tpu_custom_call.1} parent=5 // pred_fallthru
        _
      %p324 = scmp.le.s32.totalorder 2, %s12
      // Predicated region
      $region41: #{tpu_custom_call.1} parent=5 // pred_check
        %p325 = pneg %p324
      $region42: #{tpu_custom_call.1} parent=5 // pred_check_branch
        %327 = sbr.rel (%p325) target = $region44
      $region43: #{tpu_custom_call.1} parent=5 // pred_region
        %s328 = ssub.s32 %s12, 2
        // Predicated region
        $region45: #{tpu_custom_call.1} parent=43 // pred_check
          %p329 = pneg %p125
        $region46: #{tpu_custom_call.1} parent=43 // pred_check_branch
          %331 = sbr.rel (%p329) target = $region48
        $region47: #{tpu_custom_call.1} parent=43 // pred_region
          %s332 = smul.u32 2, %s24
          %p333 = scmp.lt.s32.totalorder %s23, 1
          %s334 = scalar_select %p333, %s23, 1
          %p335 = scmp.lt.s32.totalorder %s332, 1
          %s336 = scalar_select %p335, %s332, 1
          %s337 = smul.addr %s334, 2
          %s338 = sadd.s32 %s336, %s337
          %s339 = smul.addr %s338, 8
          %s340 = scalar_lea.vmem %s3, %s339
        $region48: #{tpu_custom_call.1} parent=43 // pred_fallthru
          _
      $region44: #{tpu_custom_call.1} parent=5 // pred_fallthru
        _
    $region6: #{tpu_custom_call.1} parent=1 // loop_footer
      %s16 = sadd.s32 1, %s12
    $region7: #{tpu_custom_call.1} parent=1 // loop_footer_branch
      %11 = sbr.rel target = $region3
    $region8: #{tpu_custom_call.1} parent=1 // loop_exit
      _
    %341 = vsyncpa [#allocation3], 1
    %s342 = scalar_lea.sflag [#allocation3], 1
    %343 = vsyncpa %s342, 1

</llo_original>
